<compile_context>
chip_gen: v7x
topology: tpu7x:2x2x1
jax: 0.10.0
libtpu: 0.0.40
codegen_flags: <defaults>
</compile_context>

<pallas_src>
import jax
import jax.numpy as jnp
from jax.experimental import pallas as pl
from jax.experimental.pallas import tpu as pltpu

_LANES = 128
_SUBLANES = 8
_GRAIN = _LANES * _SUBLANES            # 1024 elements: minimal (8,128) tile
_TARGET_BLOCK_ELEMS = 512 * 1024       # ~2 MiB of f32 output per grid step


def _ste_kernel(x_ref, o_ref):
    # Pure VPU elementwise compare + cast; never the bottleneck (HBM-bound op).
    o_ref[...] = (x_ref[...] > 0).astype(jnp.float32)


def _largest_tile_rows(rows: int, target_rows: int) -> int:
    """Largest multiple-of-8 divisor of `rows` that is <= target_rows.

    Prefers leaving >= 2 grid steps so the 'parallel' grid axis can shard
    across both v7x TensorCores. `rows` is always a multiple of 8.
    """
    cap = min(target_rows, rows)
    if cap >= rows and rows >= 16:
        cap = rows // 2
    cap = max(_SUBLANES, (cap // _SUBLANES) * _SUBLANES)
    for t in range(cap, _SUBLANES - 1, -_SUBLANES):
        if rows % t == 0:
            return t
    return _SUBLANES


def straight_through_estimator(x, beta: float = 1.0):
    """Forward pass of StraightThroughEstimator: (x > 0).float()."""
    del beta  # forward output is independent of beta
    orig_shape = x.shape
    size = x.size
    if size == 0:
        return jnp.zeros(orig_shape, jnp.float32)

    # ---- choose a (rows, C) lane-dense slab ------------------------------
    if size % _GRAIN == 0:
        padded = size                      # fast path: no pad, no slice
    else:
        padded = ((size + _GRAIN - 1) // _GRAIN) * _GRAIN

    # Widest power-of-two lane dim (longer contiguous DMA rows, unmasked
    # wide stores) that keeps the row count a multiple of 8.
    lane_c = _LANES
    for cand in (4096, 2048, 1024, 512, 256):
        if padded % (_SUBLANES * cand) == 0:
            lane_c = cand
            break

    rows = padded // lane_c
    target_rows = max(_SUBLANES, _TARGET_BLOCK_ELEMS // lane_c)
    tile_rows = _largest_tile_rows(rows, target_rows)

    # If divisibility forces tiny tiles on a big problem, pad the row count up
    # to a multiple of the target tile instead (one extra copy beats an
    # overhead-bound grid of 4 KiB steps, and blocks never exceed VMEM).
    if rows > 4 * target_rows and tile_rows < target_rows // 4:
        rows = ((rows + target_rows - 1) // target_rows) * target_rows
        padded = rows * lane_c
        tile_rows = target_rows

    x_flat = jnp.ravel(x)                  # native dtype; cast happens in-kernel
    if padded != size:
        x_flat = jnp.pad(x_flat, (0, padded - size))
    x2d = x_flat.reshape(rows, lane_c)

    grid = (rows // tile_rows,)

    out2d = pl.pallas_call(
        _ste_kernel,
        out_shape=jax.ShapeDtypeStruct((rows, lane_c), jnp.float32),
        grid_spec=pltpu.PrefetchScalarGridSpec(
            num_scalar_prefetch=0,
            grid=grid,
            in_specs=[pl.BlockSpec((tile_rows, lane_c), lambda i: (i, 0))],
            out_specs=pl.BlockSpec((tile_rows, lane_c), lambda i: (i, 0)),
        ),
        compiler_params=pltpu.CompilerParams(
            dimension_semantics=("parallel",),
        ),
    )(x2d)

    if padded == size:
        return out2d.reshape(orig_shape)
    return out2d.reshape(-1)[:size].reshape(orig_shape)


if __name__ == "__main__":
    key = jax.random.PRNGKey(0)

    # Small NCHW-style input consistent with the module's elementwise forward.
    x = jax.random.normal(key, (2, 4, 16, 16), dtype=jnp.float32)
    out = straight_through_estimator(x, beta=1.0)
    out = jax.block_until_ready(out)

    ref = (x > 0).astype(jnp.float32)
    assert out.shape == ref.shape, (out.shape, ref.shape)
    assert out.dtype == jnp.float32
    assert bool(jnp.all(out == ref)), "mismatch vs reference (aligned path)"

    # Exercise the ragged (pad + slice) fallback path as well.
    x2 = jax.random.normal(jax.random.PRNGKey(1), (3, 5, 7), dtype=jnp.float32)
    out2 = jax.block_until_ready(straight_through_estimator(x2))
    ref2 = (x2 > 0).astype(jnp.float32)
    assert out2.shape == ref2.shape
    assert bool(jnp.all(out2 == ref2)), "mismatch vs reference (ragged path)"

    print("KERNEL_OK")
</pallas_src>

<mosaic_0001>
module attributes {stable_mosaic.version = 11 : i64} {
  func.func @_ste_kernel(%arg0: i32, %arg1: memref<8x256xf32, #tpu.memory_space<vmem>>, %arg2: memref<8x256xf32, #tpu.memory_space<vmem>>) attributes {dimension_semantics = [#tpu.dimension_semantics<parallel>], iteration_bounds = array<i64: 1>, scalar_prefetch = 0 : i64, scratch_operands = 0 : i64, tpu.core_type = #tpu.core_type<tc>, window_params = [{transform_indices = @transform_0, window_bounds = array<i64: 8, 256>}, {transform_indices = @transform_1, window_bounds = array<i64: 8, 256>}]} {
    %c0 = arith.constant 0 : index
    %c0_0 = arith.constant 0 : index
    %0 = vector.load %arg1[%c0, %c0_0] : memref<8x256xf32, #tpu.memory_space<vmem>>, vector<8x256xf32>
    %cst = arith.constant 0.000000e+00 : f32
    %1 = vector.broadcast %cst : f32 to vector<8x256xf32>
    %2 = arith.cmpf ogt, %0, %1 : vector<8x256xf32>
    %3 = arith.extui %2 : vector<8x256xi1> to vector<8x256xi32>
    %4 = arith.sitofp %3 : vector<8x256xi32> to vector<8x256xf32>
    %c0_1 = arith.constant 0 : index
    %c0_2 = arith.constant 0 : index
    %5 = vector.load %arg2[%c0_1, %c0_2] : memref<8x256xf32, #tpu.memory_space<vmem>>, vector<8x256xf32>
    tpu.vector_store %arg2[%c0_1, %c0_2], %4 {strides = array<i32>} : memref<8x256xf32, #tpu.memory_space<vmem>>, vector<8x256xf32>,
    return
  }
  func.func @transform_0(%arg0: i32) -> (i32, i32) {
    %c0_i32 = arith.constant 0 : i32
    %c0_i32_0 = arith.constant 0 : i32
    return %arg0, %c0_i32 : i32, i32
  }
  func.func @transform_1(%arg0: i32) -> (i32, i32) {
    %c0_i32 = arith.constant 0 : i32
    %c0_i32_0 = arith.constant 0 : i32
    return %arg0, %c0_i32 : i32, i32
  }
}

</mosaic_0001>

<llo_original>
// kernel: tpu_custom_call.1
$region0: #{tpu_custom_call.1}
  #allocation0 [shape = 'u32[]', space=smem, size = 0x4, offset = 0x4, fixed_abs, tag = 'smem constant byte address 0x4 - core index']
  #allocation1 [shape = 'u32[144,128]{1,0:T(1,128)}', space=vmem, size = 0x12000, scoped, tag = 'internal scratch']
  %s0 = inlined_call_operand.hbm [shape: f32[8,256], index: 0, kind: input, shape index: {}]
  %s1 = inlined_call_operand.hbm [shape: f32[8,256], index: 1, kind: output, shape index: {}]
  %s2 = sld [smem:[#allocation0]]
  $region18: #{tpu_custom_call.1} parent=0
    _
  %s4 = ssub.s32 1, %s2
  %s5 = scalar_select 0, %s4, %s2
  $region1: #{tpu_custom_call.1} parent=0
    #allocation2 [shape = 'u8[8192]{0}', space=vmem, size = 0x2000, scoped, tag = 'input window, operand 0, single buffered']
    #allocation3 [shape = 's32[1]{0}', space=sflag, size = 0x4, scoped, tag = 'scoped memory for tpu_custom_call.1']
    #allocation4 [shape = 's32[1]{0}', space=sflag, size = 0x4, scoped, tag = 'scoped memory for tpu_custom_call.1']
    #allocation5 [shape = 'u8[8192]{0}', space=vmem, size = 0x2000, scoped, tag = 'output window, operand 0, single buffered']
    %6 = vsyncpa [#allocation3], 0
    %7 = vsyncpa [#allocation4], 0
    // Predicated region
    $region2: #{tpu_custom_call.1} parent=1 // pred_check
      _
    $region3: #{tpu_custom_call.1} parent=1 // pred_check_branch
      %9 = sbr.rel (0) target = $region5
    $region4: #{tpu_custom_call.1} parent=1 // pred_region
      %s11 = ssub.s32 256, 256
      %12 = vsyncadd [#allocation3], %s11
      %s14 = sshll.u32 [#allocation2], 4
      %s15 = int_to_ptr.vmem [resolvable:$true] %s14
      %17 = dma.hbm_to_vmem [thread:$0]  %s0, 256, %s15, [#allocation3]
    $region5: #{tpu_custom_call.1} parent=1 // pred_fallthru
      _
    // Predicated region
    $region6: #{tpu_custom_call.1} parent=1 // pred_check
      _
    $region7: #{tpu_custom_call.1} parent=1 // pred_check_branch
      %19 = sbr.rel (0) target = $region9
    $region8: #{tpu_custom_call.1} parent=1 // pred_region
      %20 = dma.done [#allocation3], 256
    $region9: #{tpu_custom_call.1} parent=1 // pred_fallthru
      _
    %v21 = vld [vmem:[#allocation2] sm:$0xff]
    %v22 = vld [vmem:[#allocation2 + $0x8] sm:$0xff]
    %vm23 = vcmp.gt.f32.partialorder %v21, 0.0
    %vm24 = vcmp.gt.f32.partialorder %v22, 0.0
    %v25 = vsel %vm23, 1, 0
    %v26 = vsel %vm24, 1, 0
    %v27 = vcvt.s32.f32 %v25
    %v28 = vcvt.s32.f32 %v26
    %29 = vst [vmem:[#allocation5] sm:$0xff] %v27
    %30 = vst [vmem:[#allocation5 + $0x8] sm:$0xff] %v28
    // Predicated region
    $region10: #{tpu_custom_call.1} parent=1 // pred_check
      _
    $region11: #{tpu_custom_call.1} parent=1 // pred_check_branch
      %32 = sbr.rel (0) target = $region13
    $region12: #{tpu_custom_call.1} parent=1 // pred_region
      %s34 = ssub.s32 256, 256
      %35 = vsyncadd [#allocation4], %s34
      %s37 = sshll.u32 [#allocation5], 4
      %s38 = int_to_ptr.vmem [resolvable:$true] %s37
      %40 = dma.vmem_to_hbm [thread:$0]  %s38, 256, %s1, [#allocation4]
    $region13: #{tpu_custom_call.1} parent=1 // pred_fallthru
      _
    // Predicated region
    $region14: #{tpu_custom_call.1} parent=1 // pred_check
      _
    $region15: #{tpu_custom_call.1} parent=1 // pred_check_branch
      %42 = sbr.rel (0) target = $region17
    $region16: #{tpu_custom_call.1} parent=1 // pred_region
      %43 = dma.done [#allocation4], 256
    $region17: #{tpu_custom_call.1} parent=1 // pred_fallthru
      _
    %44 = vsyncpa [#allocation3], 1
    %45 = vsyncpa [#allocation4], 1

</llo_original>
